<compile_context>
chip_gen: v5e
topology: v5e:2x2
jax: 0.10.0
libtpu: 0.0.40
codegen_flags: <defaults>
</compile_context>

<pallas_src>
import functools

import jax
import jax.numpy as jnp
from jax import lax
from jax.experimental import pallas as pl
from jax.experimental.pallas import tpu as pltpu


def _ece_tile_kernel(logits_ref, labels_ref, out_ref, *, total_n, n_bins):
    """Per-tile binned partial sums: out[0] = [count; sum_conf; sum_acc; 0...]."""
    logits = logits_ref[...].astype(jnp.float32)   # (T, C) upcast per tile
    labels = labels_ref[...]                       # (T, 1) int32
    t, c = logits.shape

    # --- softmax-free confidence + first-argmax (reuses the same row max) ----
    m = jnp.max(logits, axis=1, keepdims=True)                       # (T, 1)
    denom = jnp.sum(jnp.exp(logits - m), axis=1, keepdims=True)      # (T, 1)
    conf = 1.0 / denom          # == max(softmax(logits)); keep exact divide

    ids = lax.broadcasted_iota(jnp.int32, (t, c), 1)
    pred = jnp.min(jnp.where(logits == m, ids, c), axis=1, keepdims=True)
    acc = (pred == labels).astype(jnp.float32)                       # (T, 1)

    # --- mask rows past total_n (partial last tile) ---------------------------
    row = pl.program_id(0) * t + lax.broadcasted_iota(jnp.int32, (t, 1), 0)
    valid = row < total_n
    valid_f = valid.astype(jnp.float32)
    conf = jnp.where(valid, conf, 0.0)
    acc = jnp.where(valid, acc, 0.0)

    # --- uniform bins: one-hot index instead of two broadcast compares -------
    # bin_idx = clamp(ceil(conf*B)-1, 0, B-1) reproduces torch's
    # (conf > lower) & (conf <= upper) for conf > 0 (always true: conf >= 1/C).
    bin_idx = jnp.clip(
        jnp.ceil(conf * jnp.float32(n_bins)).astype(jnp.int32) - 1, 0, n_bins - 1)
    cols_b = lax.broadcasted_iota(jnp.int32, (t, n_bins), 1)
    in_bin = (cols_b == bin_idx).astype(jnp.float32)                 # (T, B)

    # --- fuse the 3 binned reductions into one MXU contraction ---------------
    col8 = lax.broadcasted_iota(jnp.int32, (t, 8), 1)
    stacked = jnp.where(col8 == 0, valid_f,
               jnp.where(col8 == 1, conf,
                jnp.where(col8 == 2, acc, 0.0)))                     # (T, 8)
    # Transposed-LHS contraction (dim 0 of both operands). Not on the critical
    # path; TODO(synk): check MLIR for a per-tile (T,8) vxpose if XLU ever binds.
    partial = lax.dot_general(stacked, in_bin,
                              dimension_numbers=(((0,), (0,)), ((), ())),
                              preferred_element_type=jnp.float32)    # (8, B)
    out_ref[0] = partial


def _vmem_capacity_bytes():
    try:
        cap = getattr(pltpu.get_tpu_info(), "vmem_capacity_bytes", None)
        if cap:
            return int(cap)
    except Exception:
        pass
    return 64 * 1024 * 1024     # conservative fallback (v7x per-TC VMEM)


def _pick_tiling(n, c, n_bins, itemsize, max_tile_n=None):
    """Generation-aware tile_n / vmem_limit from a VMEM budget formula."""
    cap = _vmem_capacity_bytes()
    # v7x (64 MiB) -> ~38 MiB limit; v5e/v6e (128 MiB) -> ~77 MiB limit.
    vmem_limit = min(int(0.6 * cap), 100 * 1024 * 1024)
    # Per-row VMEM: double-buffered logits+labels tiles plus ~6 f32
    # (T, max(C,B)) in-kernel temporaries (upcast logits, exp, in_bin, stacked).
    per_row = 2 * (c * itemsize + 4) + 6 * max(c, n_bins) * 4 + 64
    budget = int(0.65 * vmem_limit)
    tile_n = budget // per_row
    tile_n = int(max(8, min(tile_n, 32768)))
    tile_n = (tile_n // 8) * 8          # sublane-aligned
    if max_tile_n is not None:
        tile_n = min(tile_n, max(8, (int(max_tile_n) // 8) * 8))
    if n <= tile_n:
        tile_n = n                      # single full-extent block is legal
    return tile_n, vmem_limit


def ece_loss(logits, labels, num_classes, n_bins=None, use_softmax=True,
             max_tile_n=None):
    """Pallas implementation of ECELoss.forward (use_softmax=True path)."""
    assert use_softmax, "only use_softmax=True is implemented"
    if n_bins is None:
        n_bins = num_classes

    n, c = logits.shape
    labels2 = labels.reshape(n, 1).astype(jnp.int32)
    itemsize = jnp.dtype(logits.dtype).itemsize

    tile_n, vmem_limit = _pick_tiling(n, c, n_bins, itemsize, max_tile_n)
    num_blocks = pl.cdiv(n, tile_n)

    kernel = functools.partial(_ece_tile_kernel, total_n=n, n_bins=n_bins)

    cost = pl.CostEstimate(
        flops=int(n * (6 * c + 4 * n_bins) + 2 * n * 8 * n_bins),
        transcendentals=int(n * c),
        bytes_accessed=int(n * c * itemsize + 4 * n + num_blocks * 8 * n_bins * 4),
    )

    partials = pl.pallas_call(
        kernel,
        out_shape=jax.ShapeDtypeStruct((num_blocks, 8, n_bins), jnp.float32),
        grid_spec=pltpu.PrefetchScalarGridSpec(
            num_scalar_prefetch=0,
            grid=(num_blocks,),
            in_specs=[
                pl.BlockSpec((tile_n, c), lambda i: (i, 0)),      # logits tile
                pl.BlockSpec((tile_n, 1), lambda i: (i, 0)),      # labels tile
            ],
            out_specs=pl.BlockSpec((1, 8, n_bins), lambda i: (i, 0, 0)),
        ),
        compiler_params=pltpu.CompilerParams(
            dimension_semantics=("parallel",),   # megacore-shards N on v7x
            vmem_limit_bytes=vmem_limit,
        ),
        cost_estimate=cost,
    )(logits, labels2)

    # Finalize outside the kernel: sum per-tile/per-core totals FIRST (ECE is
    # nonlinear in bin totals), then apply the gap formula. Cost is negligible.
    totals = jnp.sum(partials, axis=0)           # (8, B)
    count, sum_conf, sum_acc = totals[0], totals[1], totals[2]
    safe = jnp.maximum(count, 1.0)
    prop = count / jnp.float32(n)                # uses TOTAL N
    gap = jnp.abs(sum_conf - sum_acc) / safe * prop
    ece = jnp.sum(jnp.where(count > 0, gap, 0.0))
    return ece.reshape(1)


def _ece_reference(logits, labels, num_classes, n_bins=None):
    """Pure-JAX reference mirroring the torch loop (for verification)."""
    if n_bins is None:
        n_bins = num_classes
    probs = jax.nn.softmax(logits.astype(jnp.float32), axis=1)
    conf = jnp.max(probs, axis=1)
    pred = jnp.argmax(probs, axis=1)
    acc = (pred == labels).astype(jnp.float32)
    bounds = jnp.linspace(0.0, 1.0, n_bins + 1, dtype=jnp.float32)
    ece = 0.0
    n = logits.shape[0]
    for b in range(n_bins):
        in_bin = jnp.logical_and(conf > bounds[b], conf <= bounds[b + 1])
        cnt = jnp.sum(in_bin.astype(jnp.float32))
        prop = cnt / n
        acc_in = jnp.sum(jnp.where(in_bin, acc, 0.0)) / jnp.maximum(cnt, 1.0)
        conf_in = jnp.sum(jnp.where(in_bin, conf, 0.0)) / jnp.maximum(cnt, 1.0)
        ece = ece + jnp.where(cnt > 0, jnp.abs(conf_in - acc_in) * prop, 0.0)
    return jnp.reshape(ece, (1,))


if __name__ == "__main__":
    key = jax.random.PRNGKey(0)
    k1, k2 = jax.random.split(key)

    # Small shapes: 100 samples, 8 classes (n_bins defaults to num_classes).
    N, C = 100, 8
    logits = jax.random.normal(k1, (N, C), dtype=jnp.float32) * 3.0
    labels = jax.random.randint(k2, (N,), 0, C, dtype=jnp.int32)

    ref = jax.block_until_ready(_ece_reference(logits, labels, num_classes=C))

    # Multi-tile path: tile_n=32 -> 4 grid steps, partial last tile (row mask).
    out_tiled = jax.block_until_ready(
        ece_loss(logits, labels, num_classes=C, max_tile_n=32))
    # Auto-budgeted path: single full-extent block at this size.
    out_auto = jax.block_until_ready(ece_loss(logits, labels, num_classes=C))

    assert out_tiled.shape == (1,) and out_auto.shape == (1,)
    assert jnp.allclose(out_tiled, ref, atol=1e-5), (out_tiled, ref)
    assert jnp.allclose(out_auto, ref, atol=1e-5), (out_auto, ref)
    print("KERNEL_OK")
</pallas_src>

<mosaic_0001>
module attributes {stable_mosaic.version = 11 : i64} {
  func.func @_ece_tile_kernel(%arg0: i32, %arg1: memref<32x8xf32, #tpu.memory_space<vmem>>, %arg2: memref<32x1xi32, #tpu.memory_space<vmem>>, %arg3: memref<1x8x8xf32, #tpu.memory_space<vmem>>) attributes {dimension_semantics = [#tpu.dimension_semantics<parallel>], iteration_bounds = array<i64: 4>, scalar_prefetch = 0 : i64, scratch_operands = 0 : i64, tpu.core_type = #tpu.core_type<tc>, window_params = [{transform_indices = @transform_0, window_bounds = array<i64: 32, 8>}, {transform_indices = @transform_1, window_bounds = array<i64: 32, 1>}, {transform_indices = @transform_2, window_bounds = array<i64: 1, 8, 8>}]} {
    %c0 = arith.constant 0 : index
    %c0_0 = arith.constant 0 : index
    %0 = vector.load %arg1[%c0, %c0_0] : memref<32x8xf32, #tpu.memory_space<vmem>>, vector<32x8xf32>
    %c0_1 = arith.constant 0 : index
    %c0_2 = arith.constant 0 : index
    %1 = vector.load %arg2[%c0_1, %c0_2] : memref<32x1xi32, #tpu.memory_space<vmem>>, vector<32x1xi32>
    %cst = arith.constant dense<0xFF800000> : vector<32xf32>
    %2 = vector.multi_reduction <maximumf>, %0, %cst [1] : vector<32x8xf32> to vector<32xf32>
    %3 = vector.shape_cast %2 : vector<32xf32> to vector<32x1xf32>
    %4 = vector.broadcast %3 : vector<32x1xf32> to vector<32x8xf32>
    %5 = arith.subf %0, %4 : vector<32x8xf32>
    %6 = math.exp %5 : vector<32x8xf32>
    %cst_3 = arith.constant dense<0.000000e+00> : vector<32xf32>
    %7 = vector.multi_reduction <add>, %6, %cst_3 [1] : vector<32x8xf32> to vector<32xf32>
    %8 = vector.shape_cast %7 : vector<32xf32> to vector<32x1xf32>
    %cst_4 = arith.constant 1.000000e+00 : f32
    %9 = vector.broadcast %cst_4 : f32 to vector<32x1xf32>
    %10 = arith.divf %9, %8 : vector<32x1xf32>
    %11 = tpu.iota {dimensions = array<i32: 1>} : vector<32x8xi32>
    %12 = vector.broadcast %3 : vector<32x1xf32> to vector<32x8xf32>
    %13 = arith.cmpf oeq, %0, %12 : vector<32x8xf32>
    %c8_i32 = arith.constant 8 : i32
    %14 = vector.broadcast %c8_i32 : i32 to vector<32x8xi32>
    %15 = arith.select %13, %11, %14 : vector<32x8xi1>, vector<32x8xi32>
    %cst_5 = arith.constant dense<2147483647> : vector<32xi32>
    %16 = vector.multi_reduction <minsi>, %15, %cst_5 [1] : vector<32x8xi32> to vector<32xi32>
    %17 = vector.shape_cast %16 : vector<32xi32> to vector<32x1xi32>
    %18 = arith.cmpi eq, %17, %1 : vector<32x1xi32>
    %19 = arith.extui %18 : vector<32x1xi1> to vector<32x1xi32>
    %20 = arith.sitofp %19 : vector<32x1xi32> to vector<32x1xf32>
    %c32_i32 = arith.constant 32 : i32
    %21 = arith.muli %arg0, %c32_i32 : i32
    %22 = tpu.iota {dimensions = array<i32: 0>} : vector<32x1xi32>
    %23 = vector.broadcast %21 : i32 to vector<32x1xi32>
    %24 = arith.addi %23, %22 : vector<32x1xi32>
    %c100_i32 = arith.constant 100 : i32
    %25 = vector.broadcast %c100_i32 : i32 to vector<32x1xi32>
    %26 = arith.cmpi slt, %24, %25 : vector<32x1xi32>
    %27 = arith.extui %26 : vector<32x1xi1> to vector<32x1xi32>
    %28 = arith.sitofp %27 : vector<32x1xi32> to vector<32x1xf32>
    %cst_6 = arith.constant 0.000000e+00 : f32
    %29 = vector.broadcast %cst_6 : f32 to vector<32x1xf32>
    %30 = arith.select %26, %10, %29 : vector<32x1xi1>, vector<32x1xf32>
    %cst_7 = arith.constant 0.000000e+00 : f32
    %31 = vector.broadcast %cst_7 : f32 to vector<32x1xf32>
    %32 = arith.select %26, %20, %31 : vector<32x1xi1>, vector<32x1xf32>
    %cst_8 = arith.constant 8.000000e+00 : f32
    %33 = vector.broadcast %cst_8 : f32 to vector<32x1xf32>
    %34 = arith.mulf %30, %33 : vector<32x1xf32>
    %35 = math.ceil %34 : vector<32x1xf32>
    %36 = arith.fptosi %35 : vector<32x1xf32> to vector<32x1xi32>
    %c1_i32 = arith.constant 1 : i32
    %37 = vector.broadcast %c1_i32 : i32 to vector<32x1xi32>
    %38 = arith.subi %36, %37 : vector<32x1xi32>
    %c0_i32 = arith.constant 0 : i32
    %c7_i32 = arith.constant 7 : i32
    %39 = vector.broadcast %c0_i32 : i32 to vector<32x1xi32>
    %40 = arith.maxsi %39, %38 : vector<32x1xi32>
    %41 = vector.broadcast %c7_i32 : i32 to vector<32x1xi32>
    %42 = arith.minsi %41, %40 : vector<32x1xi32>
    %43 = tpu.iota {dimensions = array<i32: 1>} : vector<32x8xi32>
    %44 = vector.broadcast %42 : vector<32x1xi32> to vector<32x8xi32>
    %45 = arith.cmpi eq, %43, %44 : vector<32x8xi32>
    %46 = arith.extui %45 : vector<32x8xi1> to vector<32x8xi32>
    %47 = arith.sitofp %46 : vector<32x8xi32> to vector<32x8xf32>
    %48 = tpu.iota {dimensions = array<i32: 1>} : vector<32x8xi32>
    %c0_i32_9 = arith.constant 0 : i32
    %49 = vector.broadcast %c0_i32_9 : i32 to vector<32x8xi32>
    %50 = arith.cmpi eq, %48, %49 : vector<32x8xi32>
    %c1_i32_10 = arith.constant 1 : i32
    %51 = vector.broadcast %c1_i32_10 : i32 to vector<32x8xi32>
    %52 = arith.cmpi eq, %48, %51 : vector<32x8xi32>
    %c2_i32 = arith.constant 2 : i32
    %53 = vector.broadcast %c2_i32 : i32 to vector<32x8xi32>
    %54 = arith.cmpi eq, %48, %53 : vector<32x8xi32>
    %cst_11 = arith.constant 0.000000e+00 : f32
    %55 = vector.shape_cast %32 : vector<32x1xf32> to vector<32x1xf32>
    %56 = vector.broadcast %55 : vector<32x1xf32> to vector<32x8xf32>
    %57 = vector.broadcast %cst_11 : f32 to vector<32x8xf32>
    %58 = arith.select %54, %56, %57 : vector<32x8xi1>, vector<32x8xf32>
    %59 = vector.shape_cast %30 : vector<32x1xf32> to vector<32x1xf32>
    %60 = vector.broadcast %59 : vector<32x1xf32> to vector<32x8xf32>
    %61 = arith.select %52, %60, %58 : vector<32x8xi1>, vector<32x8xf32>
    %62 = vector.shape_cast %28 : vector<32x1xf32> to vector<32x1xf32>
    %63 = vector.broadcast %62 : vector<32x1xf32> to vector<32x8xf32>
    %64 = arith.select %50, %63, %61 : vector<32x8xi1>, vector<32x8xf32>
    %cst_12 = arith.constant dense<0.000000e+00> : vector<8x8xf32>
    %65 = tpu.matmul %64, %47, %cst_12 {dimension_numbers = #tpu.dot_dimension_numbers<[0], [0], [1], [1], [0, 1, 1, 1], [], []>} : vector<32x8xf32>, vector<32x8xf32>, vector<8x8xf32> -> vector<8x8xf32>
    %c0_13 = arith.constant 0 : index
    %c0_14 = arith.constant 0 : index
    %c0_15 = arith.constant 0 : index
    %66 = vector.load %arg3[%c0_13, %c0_14, %c0_15] : memref<1x8x8xf32, #tpu.memory_space<vmem>>, vector<1x8x8xf32>
    %67 = vector.shape_cast %66 : vector<1x8x8xf32> to vector<8x8xf32>
    %68 = vector.shape_cast %65 : vector<8x8xf32> to vector<1x8x8xf32>
    tpu.vector_store %arg3[%c0_13, %c0_14, %c0_15], %68 {strides = array<i32>} : memref<1x8x8xf32, #tpu.memory_space<vmem>>, vector<1x8x8xf32>,
    return
  }
  func.func @transform_0(%arg0: i32) -> (i32, i32) {
    %c0_i32 = arith.constant 0 : i32
    %c0_i32_0 = arith.constant 0 : i32
    return %arg0, %c0_i32 : i32, i32
  }
  func.func @transform_1(%arg0: i32) -> (i32, i32) {
    %c0_i32 = arith.constant 0 : i32
    %c0_i32_0 = arith.constant 0 : i32
    return %arg0, %c0_i32 : i32, i32
  }
  func.func @transform_2(%arg0: i32) -> (i32, i32, i32) {
    %c0_i32 = arith.constant 0 : i32
    %c0_i32_0 = arith.constant 0 : i32
    %c0_i32_1 = arith.constant 0 : i32
    return %arg0, %c0_i32, %c0_i32_0 : i32, i32, i32
  }
}

</mosaic_0001>

<llo_original>
// kernel: tpu_custom_call.1
$region0: #{tpu_custom_call.1}
  #allocation0 [shape = 'u32[]', space=smem, size = 0x4, offset = 0x4, fixed_abs, tag = 'smem constant byte address 0x4 - core index']
  #allocation1 [shape = 'u32[72,128]{1,0:T(1,128)}', space=vmem, size = 0x9000, scoped, tag = 'internal scratch']
  %s0 = inlined_call_operand.vmem [shape: f32[100,8], index: 0, kind: input, shape index: {}]
  %s1 = inlined_call_operand.vmem [shape: s32[100,1], index: 1, kind: input, shape index: {}]
  %s2 = inlined_call_operand.hbm [shape: f32[4,8,8], index: 2, kind: output, shape index: {}]
  %s3 = sld [smem:[#allocation0]]
  $region41: #{tpu_custom_call.1} parent=0
    _
  %s5 = ssub.s32 1, %s3
  %s6 = scalar_select 0, %s5, %s3
  $region1: #{tpu_custom_call.1} parent=0
    #allocation2 [shape = 'u8[8192]{0}', space=vmem, size = 0x2000, scoped, tag = 'output window, operand 0']
    #allocation3 [shape = 's32[2]{0}', space=sflag, size = 0x8, scoped, tag = 'scoped memory for tpu_custom_call.1']
    %7 = vsyncpa [#allocation3], 0
    %s8 = scalar_lea.sflag [#allocation3], 1
    %9 = vsyncpa %s8, 0
    loop: start=0, step=1, limit=6
    $region2: #{tpu_custom_call.1} parent=1 // loop_pre_header
      _
    $region3: #{tpu_custom_call.1} parent=1 // loop_header
      %s11 = sphi 0, %s15
      %p12 = scmp.ge.s32.totalorder %s11, 6
      %s21 = sphi 0, %s23
      %s24 = sphi 0, %s21
      %s25 = sphi 0, %s24
      %s41 = sphi 0, %s25
      %s47 = sphi 0, %s49
      %s50 = sphi 0, %s47
      %s51 = sphi 0, %s50
      %s67 = sphi 0, %s51
      %s73 = sphi 0, %s75
      %s76 = sphi 0, %s73
      %s77 = sphi 0, %s76
      %s93 = sphi 0, %s77
    $region4: #{tpu_custom_call.1} parent=1 // loop_header_branch
      %14 = sbr.rel (%p12) target = $region8
    $region5: #{tpu_custom_call.1} parent=1 // loop_body
      %s16 = ssub.s32 %s11, 1
      %s17 = ssub.s32 %s11, 2
      %s18 = sadd.s32 %s11, 1
      %s19 = ssub.s32 %s11, %s18
      %p20 = scmp.eq.s32.totalorder %s19, 0
      %s22 = sadd.s32 %s21, 1
      %s23 = scalar_select %p20, %s21, %s22
      %p26 = pneg %p20
      %p27 = scmp.eq.s32.totalorder %s11, 3
      %p28 = por %p26, %p27
      %p29 = scmp.ne.s32.totalorder %s21, %s24
      %p30 = scmp.eq.s32.totalorder %s11, 0
      %p31 = por %p29, %p30
      %p32 = scmp.ne.s32.totalorder %s21, %s24
      %p33 = scmp.eq.s32.totalorder %s16, 3
      %p34 = por %p32, %p33
      %p35 = scmp.ne.s32.totalorder %s24, %s25
      %p36 = scmp.eq.s32.totalorder %s16, 0
      %p37 = por %p35, %p36
      %p38 = scmp.ne.s32.totalorder %s24, %s25
      %p39 = scmp.eq.s32.totalorder %s17, 3
      %p40 = por %p38, %p39
      %p42 = scmp.ne.s32.totalorder %s25, %s41
      %p43 = scmp.eq.s32.totalorder %s17, 0
      %p44 = por %p42, %p43
      %s45 = ssub.s32 %s11, %s18
      %p46 = scmp.eq.s32.totalorder %s45, 0
      %s48 = sadd.s32 %s47, 1
      %s49 = scalar_select %p46, %s47, %s48
      %p52 = pneg %p46
      %p53 = scmp.eq.s32.totalorder %s11, 3
      %p54 = por %p52, %p53
      %p55 = scmp.ne.s32.totalorder %s47, %s50
      %p56 = scmp.eq.s32.totalorder %s11, 0
      %p57 = por %p55, %p56
      %p58 = scmp.ne.s32.totalorder %s47, %s50
      %p59 = scmp.eq.s32.totalorder %s16, 3
      %p60 = por %p58, %p59
      %p61 = scmp.ne.s32.totalorder %s50, %s51
      %p62 = scmp.eq.s32.totalorder %s16, 0
      %p63 = por %p61, %p62
      %p64 = scmp.ne.s32.totalorder %s50, %s51
      %p65 = scmp.eq.s32.totalorder %s17, 3
      %p66 = por %p64, %p65
      %p68 = scmp.ne.s32.totalorder %s51, %s67
      %p69 = scmp.eq.s32.totalorder %s17, 0
      %p70 = por %p68, %p69
      %s71 = ssub.s32 %s11, %s18
      %p72 = scmp.eq.s32.totalorder %s71, 0
      %s74 = sadd.s32 %s73, 1
      %s75 = scalar_select %p72, %s73, %s74
      %p78 = pneg %p72
      %p79 = scmp.eq.s32.totalorder %s11, 3
      %p80 = por %p78, %p79
      %p81 = scmp.ne.s32.totalorder %s73, %s76
      %p82 = scmp.eq.s32.totalorder %s11, 0
      %p83 = por %p81, %p82
      %p84 = scmp.ne.s32.totalorder %s73, %s76
      %p85 = scmp.eq.s32.totalorder %s16, 3
      %p86 = por %p84, %p85
      %p87 = scmp.ne.s32.totalorder %s76, %s77
      %p88 = scmp.eq.s32.totalorder %s16, 0
      %p89 = por %p87, %p88
      %p90 = scmp.ne.s32.totalorder %s76, %s77
      %p91 = scmp.eq.s32.totalorder %s17, 3
      %p92 = por %p90, %p91
      %p94 = scmp.ne.s32.totalorder %s77, %s93
      %p95 = scmp.eq.s32.totalorder %s17, 0
      %p96 = por %p94, %p95
      %p97 = scmp.le.s32.totalorder 1, %s11
      %p98 = scmp.lt.s32.totalorder %s11, 5
      %p99 = pnand %p97, %p98
      %p100 = pneg %p99
      // Predicated region
      $region9: #{tpu_custom_call.1} parent=5 // pred_check
        _
      $region10: #{tpu_custom_call.1} parent=5 // pred_check_branch
        %102 = sbr.rel (%p99) target = $region12
      $region11: #{tpu_custom_call.1} parent=5 // pred_region
        %s103 = ssub.s32 %s11, 1
      $region12: #{tpu_custom_call.1} parent=5 // pred_fallthru
        _
      %p104 = scmp.lt.s32.totalorder %s11, 4
      // Predicated region
      $region13: #{tpu_custom_call.1} parent=5 // pred_check
        %p105 = pneg %p104
      $region14: #{tpu_custom_call.1} parent=5 // pred_check_branch
        %107 = sbr.rel (%p105) target = $region16
      $region15: #{tpu_custom_call.1} parent=5 // pred_region
        // Predicated region
        $region17: #{tpu_custom_call.1} parent=15 // pred_check
          %p108 = pneg %p31
        $region18: #{tpu_custom_call.1} parent=15 // pred_check_branch
          %110 = sbr.rel (%p108) target = $region20
        $region19: #{tpu_custom_call.1} parent=15 // pred_region
          %s111 = smul.u32 4, %s11
          %s112 = ssub.s32 13, %s111
          %p113 = scmp.lt.s32.totalorder %s112, 4
          %s114 = scalar_select %p113, %s112, 4
          %s115 = smul.u32 8, %s114
          %p116 = scmp.lt.s32.totalorder %s111, 12
          %s117 = scalar_select %p116, %s111, 12
          %s118 = smul.addr %s117, 8
          %s119 = scalar_lea.vmem %s0, %s118
          %s120 = smul.u32 4, %s11
          %s121 = ssub.s32 13, %s120
          %p122 = scmp.lt.s32.totalorder %s121, 4
          %s123 = scalar_select %p122, %s121, 4
          %s124 = smul.u32 8, %s123
        $region20: #{tpu_custom_call.1} parent=15 // pred_fallthru
          _
        // Predicated region
        $region21: #{tpu_custom_call.1} parent=15 // pred_check
          %p125 = pneg %p57
        $region22: #{tpu_custom_call.1} parent=15 // pred_check_branch
          %127 = sbr.rel (%p125) target = $region24
        $region23: #{tpu_custom_call.1} parent=15 // pred_region
          %s128 = smul.u32 4, %s11
          %s129 = ssub.s32 13, %s128
          %p130 = scmp.lt.s32.totalorder %s129, 4
          %s131 = scalar_select %p130, %s129, 4
          %s132 = smul.u32 8, %s131
          %p133 = scmp.lt.s32.totalorder %s128, 12
          %s134 = scalar_select %p133, %s128, 12
          %s135 = smul.addr %s134, 8
          %s136 = scalar_lea.vmem %s1, %s135
          %s137 = smul.u32 4, %s11
          %s138 = ssub.s32 13, %s137
          %p139 = scmp.lt.s32.totalorder %s138, 4
          %s140 = scalar_select %p139, %s138, 4
          %s141 = smul.u32 8, %s140
        $region24: #{tpu_custom_call.1} parent=15 // pred_fallthru
          _
      $region16: #{tpu_custom_call.1} parent=5 // pred_fallthru
        _
      %p142 = scmp.le.s32.totalorder 1, %s11
      %p143 = scmp.lt.s32.totalorder %s11, 5
      %p144 = pnand %p142, %p143
      %p145 = pneg %p144
      // Predicated region
      $region25: #{tpu_custom_call.1} parent=5 // pred_check
        _
      $region26: #{tpu_custom_call.1} parent=5 // pred_check_branch
        %147 = sbr.rel (%p144) target = $region28
      $region27: #{tpu_custom_call.1} parent=5 // pred_region
        %s148 = ssub.s32 %s11, 1
        %s149 = smul.u32 4, %s16
        %s150 = ssub.s32 13, %s149
        %p151 = scmp.lt.s32.totalorder %s150, 4
        %s152 = scalar_select %p151, %s150, 4
        %s153 = smul.u32 8, %s152
        %p154 = scmp.lt.s32.totalorder %s149, 12
        %s155 = scalar_select %p154, %s149, 12
        %s156 = smul.addr %s155, 8
        %s157 = scalar_lea.vmem %s0, %s156
        %p158 = pneg %p37
        %p159 = pneg %p34
        %s160 = smul.u32 4, %s16
        %s161 = ssub.s32 13, %s160
        %p162 = scmp.lt.s32.totalorder %s161, 4
        %s163 = scalar_select %p162, %s161, 4
        %s164 = smul.u32 8, %s163
        %p165 = scmp.lt.s32.totalorder %s160, 12
        %s166 = scalar_select %p165, %s160, 12
        %s167 = smul.addr %s166, 8
        %s168 = scalar_lea.vmem %s1, %s167
        %p169 = pneg %p63
        %p170 = pneg %p60
        %p171 = pneg %p89
        %p172 = pneg %p86
        %s173 = sand.u32 %s76, 1
        %s174 = scalar_lea.sflag [#allocation3], %s173
        %s175 = sand.u32 %s76, 1
        %s176 = smul.addr %s175, 8
        %s177 = scalar_lea.vmem [#allocation2], %s176
        %s178 = smul.u32 4, %s16
        %s179 = ssub.s32 13, %s178
        %p180 = scmp.lt.s32.totalorder %s179, 4
        %s181 = scalar_select %p180, %s179, 4
        %s182 = smul.u32 8, %s181
        %p183 = scmp.lt.s32.totalorder %s178, 12
        %s184 = scalar_select %p183, %s178, 12
        %s185 = smul.addr %s184, 8
        %s186 = scalar_lea.vmem %s0, %s185
        %s187 = smul.u32 4, %s16
        %s188 = ssub.s32 13, %s187
        %p189 = scmp.lt.s32.totalorder %s188, 4
        %s190 = scalar_select %p189, %s188, 4
        %s191 = smul.u32 8, %s190
        %s192 = smul.u32 4, %s16
        %s193 = ssub.s32 13, %s192
        %p194 = scmp.lt.s32.totalorder %s193, 4
        %s195 = scalar_select %p194, %s193, 4
        %s196 = smul.u32 8, %s195
        %p197 = scmp.lt.s32.totalorder %s192, 12
        %s198 = scalar_select %p197, %s192, 12
        %s199 = smul.addr %s198, 8
        %s200 = scalar_lea.vmem %s1, %s199
        %s201 = smul.u32 4, %s16
        %s202 = ssub.s32 13, %s201
        %p203 = scmp.lt.s32.totalorder %s202, 4
        %s204 = scalar_select %p203, %s202, 4
        %s205 = smul.u32 8, %s204
        %v206 = vld [vmem:[%s186] sm:$0xff]
        %v207 = vld [vmem:[%s186 + $0x8] sm:$0xff]
        %v208 = vld [vmem:[%s186 + $0x10] sm:$0xff]
        %v209 = vld [vmem:[%s186 + $0x18] sm:$0xff]
        %v210 = vld [vmem:[%s200] sm:$0xff]
        %v211 = vld [vmem:[%s200 + $0x8] sm:$0xff]
        %v212 = vld [vmem:[%s200 + $0x10] sm:$0xff]
        %v213 = vld [vmem:[%s200 + $0x18] sm:$0xff]
        %vm214 = vcmask 64512
        %v215 = vsel %vm214, %v206, -inf
        %216 = vmax.xlane.f32.xlu0 %v215
        %v217 = vpop.xlane.xlu0 %216
        %v218 = vsel %vm214, %v207, -inf
        %219 = vmax.xlane.f32.xlu0 %v218
        %v220 = vpop.xlane.xlu0 %219
        %v221 = vsel %vm214, %v208, -inf
        %222 = vmax.xlane.f32.xlu0 %v221
        %v223 = vpop.xlane.xlu0 %222
        %v224 = vsel %vm214, %v209, -inf
        %225 = vmax.xlane.f32.xlu0 %v224
        %v226 = vpop.xlane.xlu0 %225
        %v227 = vsub.f32 %v206, %v217
        %v228 = vsub.f32 %v207, %v220
        %v229 = vsub.f32 %v208, %v223
        %v230 = vsub.f32 %v209, %v226
        %v231 = vmul.f32 %v227, 1.442695
        %v232 = vpow.pop %v231
        %v233 = vmul.f32 %v228, 1.442695
        %v234 = vpow.pop %v233
        %v235 = vmul.f32 %v229, 1.442695
        %v236 = vpow.pop %v235
        %v237 = vmul.f32 %v230, 1.442695
        %v238 = vpow.pop %v237
        %v239 = vsel %vm214, %v232, 0.0
        %240 = vadd.xlane.f32.xlu0 %v239
        %v241 = vpop.xlane.xlu0 %240
        %v242 = vsel %vm214, %v234, 0.0
        %243 = vadd.xlane.f32.xlu0 %v242
        %v244 = vpop.xlane.xlu0 %243
        %v245 = vsel %vm214, %v236, 0.0
        %246 = vadd.xlane.f32.xlu0 %v245
        %v247 = vpop.xlane.xlu0 %246
        %v248 = vsel %vm214, %v238, 0.0
        %249 = vadd.xlane.f32.xlu0 %v248
        %v250 = vpop.xlane.xlu0 %249
        %v251 = vrcp.pop %v241
        %v252 = vmul.f32 %v241, %v251
        %v253 = vsub.f32 1.0, %v252
        %v254 = vmul.f32 %v251, %v253
        %v255 = vadd.f32 %v251, %v254
        %vm256 = vweird.f32 %v241
        %vm257 = vweird.f32 %v251
        %vm258 = vmor %vm256, %vm257
        %v259 = vsel %vm258, %v251, %v255
        %v260 = vand.u32 2147483647, %v241
        %vm261 = vcmp.eq.f32.partialorder %v260, 8.507059e+37
        %v262 = vand.u32 %v241, 2147483648
        %v263 = vor.u32 1.1754944e-38, %v262
        %v264 = vsel %vm261, %v263, %v259
        %v265 = vmul.f32 1.0, %v264
        %v266 = vrcp.pop %v244
        %v267 = vmul.f32 %v244, %v266
        %v268 = vsub.f32 1.0, %v267
        %v269 = vmul.f32 %v266, %v268
        %v270 = vadd.f32 %v266, %v269
        %vm271 = vweird.f32 %v244
        %vm272 = vweird.f32 %v266
        %vm273 = vmor %vm271, %vm272
        %v274 = vsel %vm273, %v266, %v270
        %v275 = vand.u32 2147483647, %v244
        %vm276 = vcmp.eq.f32.partialorder %v275, 8.507059e+37
        %v277 = vand.u32 %v244, 2147483648
        %v278 = vor.u32 1.1754944e-38, %v277
        %v279 = vsel %vm276, %v278, %v274
        %v280 = vmul.f32 1.0, %v279
        %v281 = vrcp.pop %v247
        %v282 = vmul.f32 %v247, %v281
        %v283 = vsub.f32 1.0, %v282
        %v284 = vmul.f32 %v281, %v283
        %v285 = vadd.f32 %v281, %v284
        %vm286 = vweird.f32 %v247
        %vm287 = vweird.f32 %v281
        %vm288 = vmor %vm286, %vm287
        %v289 = vsel %vm288, %v281, %v285
        %v290 = vand.u32 2147483647, %v247
        %vm291 = vcmp.eq.f32.partialorder %v290, 8.507059e+37
        %v292 = vand.u32 %v247, 2147483648
        %v293 = vor.u32 1.1754944e-38, %v292
        %v294 = vsel %vm291, %v293, %v289
        %v295 = vmul.f32 1.0, %v294
        %v296 = vrcp.pop %v250
        %v297 = vmul.f32 %v250, %v296
        %v298 = vsub.f32 1.0, %v297
        %v299 = vmul.f32 %v296, %v298
        %v300 = vadd.f32 %v296, %v299
        %vm301 = vweird.f32 %v250
        %vm302 = vweird.f32 %v296
        %vm303 = vmor %vm301, %vm302
        %v304 = vsel %vm303, %v296, %v300
        %v305 = vand.u32 2147483647, %v250
        %vm306 = vcmp.eq.f32.partialorder %v305, 8.507059e+37
        %v307 = vand.u32 %v250, 2147483648
        %v308 = vor.u32 1.1754944e-38, %v307
        %v309 = vsel %vm306, %v308, %v304
        %v310 = vmul.f32 1.0, %v309
        %v311 = vlaneseq
        %v312 = vand.u32 %v311, 127
        %vm313 = vcmp.eq.f32.partialorder %v206, %v217
        %vm314 = vcmp.eq.f32.partialorder %v207, %v220
        %vm315 = vcmp.eq.f32.partialorder %v208, %v223
        %vm316 = vcmp.eq.f32.partialorder %v209, %v226
        %v317 = vsel %vm313, %v312, 8
        %v318 = vsel %vm314, %v312, 8
        %v319 = vsel %vm315, %v312, 8
        %v320 = vsel %vm316, %v312, 8
        %v321 = vsel %vm214, %v317, 2147483647
        %v322 = vand.u32 %v321, 65535
        %v323 = vshra.s32 %v321, 16
        %v324 = vcvt.s32.f32 %v322
        %v325 = vcvt.s32.f32 %v323
        %326 = vmin.xlane.f32.xlu0 %v325
        %v327 = vpop.xlane.xlu0 %326
        %vm328 = vcmp.eq.f32.partialorder %v325, %v327
        %v329 = vsel %vm328, %v324, inf
        %330 = vmin.xlane.f32.xlu0 %v329
        %v331 = vpop.xlane.xlu0 %330
        %v332 = vcvt.f32.s32 %v331
        %v333 = vcvt.f32.s32 %v327
        %v334 = vshll.u32 %v333, 16
        %v335 = vadd.s32 %v334, %v332
        %v336 = vsel %vm214, %v318, 2147483647
        %v337 = vand.u32 %v336, 65535
        %v338 = vshra.s32 %v336, 16
        %v339 = vcvt.s32.f32 %v337
        %v340 = vcvt.s32.f32 %v338
        %341 = vmin.xlane.f32.xlu0 %v340
        %v342 = vpop.xlane.xlu0 %341
        %vm343 = vcmp.eq.f32.partialorder %v340, %v342
        %v344 = vsel %vm343, %v339, inf
        %345 = vmin.xlane.f32.xlu0 %v344
        %v346 = vpop.xlane.xlu0 %345
        %v347 = vcvt.f32.s32 %v346
        %v348 = vcvt.f32.s32 %v342
        %v349 = vshll.u32 %v348, 16
        %v350 = vadd.s32 %v349, %v347
        %v351 = vsel %vm214, %v319, 2147483647
        %v352 = vand.u32 %v351, 65535
        %v353 = vshra.s32 %v351, 16
        %v354 = vcvt.s32.f32 %v352
        %v355 = vcvt.s32.f32 %v353
        %356 = vmin.xlane.f32.xlu0 %v355
        %v357 = vpop.xlane.xlu0 %356
        %vm358 = vcmp.eq.f32.partialorder %v355, %v357
        %v359 = vsel %vm358, %v354, inf
        %360 = vmin.xlane.f32.xlu0 %v359
        %v361 = vpop.xlane.xlu0 %360
        %v362 = vcvt.f32.s32 %v361
        %v363 = vcvt.f32.s32 %v357
        %v364 = vshll.u32 %v363, 16
        %v365 = vadd.s32 %v364, %v362
        %v366 = vsel %vm214, %v320, 2147483647
        %v367 = vand.u32 %v366, 65535
        %v368 = vshra.s32 %v366, 16
        %v369 = vcvt.s32.f32 %v367
        %v370 = vcvt.s32.f32 %v368
        %371 = vmin.xlane.f32.xlu0 %v370
        %v372 = vpop.xlane.xlu0 %371
        %vm373 = vcmp.eq.f32.partialorder %v370, %v372
        %v374 = vsel %vm373, %v369, inf
        %375 = vmin.xlane.f32.xlu0 %v374
        %v376 = vpop.xlane.xlu0 %375
        %v377 = vcvt.f32.s32 %v376
        %v378 = vcvt.f32.s32 %v372
        %v379 = vshll.u32 %v378, 16
        %v380 = vadd.s32 %v379, %v377
        %vm381 = vcmp.eq.s32.totalorder %v335, %v210
        %vm382 = vcmp.eq.s32.totalorder %v350, %v211
        %vm383 = vcmp.eq.s32.totalorder %v365, %v212
        %vm384 = vcmp.eq.s32.totalorder %v380, %v213
        %v385 = vsel %vm381, 1, 0
        %v386 = vsel %vm382, 1, 0
        %v387 = vsel %vm383, 1, 0
        %v388 = vsel %vm384, 1, 0
        %v389 = vcvt.s32.f32 %v385
        %v390 = vcvt.s32.f32 %v386
        %v391 = vcvt.s32.f32 %v387
        %v392 = vcvt.s32.f32 %v388
        %s393 = smul.u32 %s16, 32
        %v394 = vlaneseq
        %v395 = vshrl.u32 %v394, 7
        %v396 = vadd.s32 %v395, 8
        %v397 = vadd.s32 %v395, 16
        %v398 = vadd.s32 %v395, 24
        %v399 = vstv %s393
        %v400 = vadd.s32 %v399, %v395
        %v401 = vadd.s32 %v399, %v396
        %v402 = vadd.s32 %v399, %v397
        %v403 = vadd.s32 %v399, %v398
        %vm404 = vcmp.lt.s32.totalorder %v400, 100
        %vm405 = vcmp.lt.s32.totalorder %v401, 100
        %vm406 = vcmp.lt.s32.totalorder %v402, 100
        %vm407 = vcmp.lt.s32.totalorder %v403, 100
        %v408 = vsel %vm404, 1, 0
        %v409 = vsel %vm405, 1, 0
        %v410 = vsel %vm406, 1, 0
        %v411 = vsel %vm407, 1, 0
        %v412 = vcvt.s32.f32 %v408
        %v413 = vcvt.s32.f32 %v409
        %v414 = vcvt.s32.f32 %v410
        %v415 = vcvt.s32.f32 %v411
        %v416 = vsel %vm404, %v265, 0.0
        %v417 = vsel %vm405, %v280, 0.0
        %v418 = vsel %vm406, %v295, 0.0
        %v419 = vsel %vm407, %v310, 0.0
        %v420 = vsel %vm404, %v389, 0.0
        %v421 = vsel %vm405, %v390, 0.0
        %v422 = vsel %vm406, %v391, 0.0
        %v423 = vsel %vm407, %v392, 0.0
        %v424 = vmul.f32 %v416, 8.0
        %v425 = vmul.f32 %v417, 8.0
        %v426 = vmul.f32 %v418, 8.0
        %v427 = vmul.f32 %v419, 8.0
        %v428 = vceil.f32 %v424
        %v429 = vceil.f32 %v425
        %v430 = vceil.f32 %v426
        %v431 = vceil.f32 %v427
        %v432 = vcvt.f32.s32.to.zero.pseudo %v428
        %v433 = vcvt.f32.s32.to.zero.pseudo %v429
        %v434 = vcvt.f32.s32.to.zero.pseudo %v430
        %v435 = vcvt.f32.s32.to.zero.pseudo %v431
        %v436 = vsub.s32 %v432, 1
        %v437 = vsub.s32 %v433, 1
        %v438 = vsub.s32 %v434, 1
        %v439 = vsub.s32 %v435, 1
        %vm440 = vcmp.gt.s32.totalorder %v436, 0
        %v441 = vsel %vm440, %v436, 0
        %vm442 = vcmp.gt.s32.totalorder %v437, 0
        %v443 = vsel %vm442, %v437, 0
        %vm444 = vcmp.gt.s32.totalorder %v438, 0
        %v445 = vsel %vm444, %v438, 0
        %vm446 = vcmp.gt.s32.totalorder %v439, 0
        %v447 = vsel %vm446, %v439, 0
        %vm448 = vcmp.lt.s32.totalorder %v441, 7
        %v449 = vsel %vm448, %v441, 7
        %vm450 = vcmp.lt.s32.totalorder %v443, 7
        %v451 = vsel %vm450, %v443, 7
        %vm452 = vcmp.lt.s32.totalorder %v445, 7
        %v453 = vsel %vm452, %v445, 7
        %vm454 = vcmp.lt.s32.totalorder %v447, 7
        %v455 = vsel %vm454, %v447, 7
        %vm456 = vcmp.eq.s32.totalorder %v312, %v449
        %vm457 = vcmp.eq.s32.totalorder %v312, %v451
        %vm458 = vcmp.eq.s32.totalorder %v312, %v453
        %vm459 = vcmp.eq.s32.totalorder %v312, %v455
        %v460 = vsel %vm456, 1, 0
        %v461 = vsel %vm457, 1, 0
        %v462 = vsel %vm458, 1, 0
        %v463 = vsel %vm459, 1, 0
        %v464 = vcvt.s32.f32 %v460
        %v465 = vcvt.s32.f32 %v461
        %v466 = vcvt.s32.f32 %v462
        %v467 = vcvt.s32.f32 %v463
        %vm468 = vcmp.eq.s32.totalorder %v312, 0
        %vm469 = vcmp.eq.s32.totalorder %v312, 1
        %vm470 = vcmp.eq.s32.totalorder %v312, 2
        %472 = vset.pattern.permute.xlu0 0
        %473 = vperm.xlu0 %472, %v420
        %v474 = vpop.permute.xlu0 %473
        %477 = vset.pattern.permute.xlu0 0
        %478 = vperm.xlu0 %477, %v421
        %v479 = vpop.permute.xlu0 %478
        %482 = vset.pattern.permute.xlu0 0
        %483 = vperm.xlu0 %482, %v422
        %v484 = vpop.permute.xlu0 %483
        %487 = vset.pattern.permute.xlu0 0
        %488 = vperm.xlu0 %487, %v423
        %v489 = vpop.permute.xlu0 %488
        %v491 = vsel %vm470, %v474, 0.0
        %v492 = vsel %vm470, %v479, 0.0
        %v493 = vsel %vm470, %v484, 0.0
        %v494 = vsel %vm470, %v489, 0.0
        %v495 = vsel %vm469, %v416, %v491
        %v496 = vsel %vm469, %v417, %v492
        %v497 = vsel %vm469, %v418, %v493
        %v498 = vsel %vm469, %v419, %v494
        %v499 = vsel %vm468, %v412, %v495
        %v500 = vsel %vm468, %v413, %v496
        %v501 = vsel %vm468, %v414, %v497
        %v502 = vsel %vm468, %v415, %v498
        %503 = vxpose.xlu0.b32.start [1/16] %v499, 128
        %504 = vxpose.xlu0.b32.cont [2/16] %v500, 128
        %505 = vxpose.xlu0.b32.cont [3/16] %v501, 128
        %506 = vxpose.xlu0.b32.cont [4/16] %v502, 128
        %507 = vxpose.xlu0.b32.cont [5/16] 0.0, 128
        %508 = vxpose.xlu0.b32.cont [6/16] 0.0, 128
        %509 = vxpose.xlu0.b32.cont [7/16] 0.0, 128
        %510 = vxpose.xlu0.b32.cont [8/16] 0.0, 128
        %511 = vxpose.xlu0.b32.cont [9/16] 0.0, 128
        %512 = vxpose.xlu0.b32.cont [10/16] 0.0, 128
        %513 = vxpose.xlu0.b32.cont [11/16] 0.0, 128
        %514 = vxpose.xlu0.b32.cont [12/16] 0.0, 128
        %515 = vxpose.xlu0.b32.cont [13/16] 0.0, 128
        %516 = vxpose.xlu0.b32.cont [14/16] 0.0, 128
        %517 = vxpose.xlu0.b32.cont [15/16] 0.0, 128
        %518 = vxpose.xlu0.b32.end [16/16] 0.0, 128
        %v519 = vpop.trf.xlu0
        %v520 = vpop.trf.xlu0
        %v521 = vpop.trf.xlu0
        %v522 = vpop.trf.xlu0
        %v523 = vpop.trf.xlu0
        %v524 = vpop.trf.xlu0
        %v525 = vpop.trf.xlu0
        %v526 = vpop.trf.xlu0
        %v527 = vpop.trf.xlu0
        %v528 = vpop.trf.xlu0
        %v529 = vpop.trf.xlu0
        %v530 = vpop.trf.xlu0
        %v531 = vpop.trf.xlu0
        %v532 = vpop.trf.xlu0
        %v533 = vpop.trf.xlu0
        %v534 = vpop.trf.xlu0
        %vm535 = vcmask 261120
        %v537 = vsel %vm535, %v519, 0
        %539 = vmatpush.msra.mxu0 0.0
        %540 = vmatpush.msra.mxu0 0.0
        %541 = vmatpush.msra.mxu0 0.0
        %542 = vmatpush.msra.mxu0 0.0
        %543 = vmatpush.msra.mxu0 0.0
        %544 = vmatpush.msra.mxu0 0.0
        %545 = vmatpush.msra.mxu0 0.0
        %546 = vmatpush.msra.mxu0 0.0
        %547 = vmatpush.msra.mxu0 0.0
        %548 = vmatpush.msra.mxu0 0.0
        %549 = vmatpush.msra.mxu0 0.0
        %550 = vmatpush.msra.mxu0 0.0
        %551 = vmatpush.msra.mxu0 %v467
        %552 = vmatpush.msra.mxu0 %v466
        %553 = vmatpush.msra.mxu0 %v465
        %554 = vmatpush.msra.mxu0 %v464
        %555 = vmatmul.f32.gmra.mxu0 %v537
        %v556 = vpop.f32.mrf.mxu0
        %v557 = vadd.f32 0.0, %v556
        %558 = vdwg.mxu0
        %559 = vst.msk [vmem:[%s177] sm:$0xff] %vm214, %v557
        %s560 = sand.u32 %s76, 1
        %s561 = scalar_lea.sflag [#allocation3], %s560
        %s562 = sand.u32 %s76, 1
        %s563 = smul.addr %s562, 8
        %s564 = scalar_lea.vmem [#allocation2], %s563
        // Predicated region
        $region29: #{tpu_custom_call.1} parent=27 // pred_check
          %p565 = pneg %p86
        $region30: #{tpu_custom_call.1} parent=27 // pred_check_branch
          %567 = sbr.rel (%p565) target = $region32
        $region31: #{tpu_custom_call.1} parent=27 // pred_region
          %569 = vsyncadd %s561, 0
          %s570 = smul.addr %s16, 8
          %s571 = scalar_lea.hbm %s2, %s570
          %s573 = sshll.u32 %s564, 4
          %s574 = int_to_ptr.vmem [resolvable:$true] %s573
          %s575 = sshll.u32 %s571, 4
          %s576 = int_to_ptr.hbm [resolvable:$true] %s575
          %578 = dma.vmem_to_hbm [thread:$0]  %s574, 128, %s576, %s561
        $region32: #{tpu_custom_call.1} parent=27 // pred_fallthru
          _
      $region28: #{tpu_custom_call.1} parent=5 // pred_fallthru
        _
      %p579 = scmp.le.s32.totalorder 2, %s11
      // Predicated region
      $region33: #{tpu_custom_call.1} parent=5 // pred_check
        %p580 = pneg %p579
      $region34: #{tpu_custom_call.1} parent=5 // pred_check_branch
        %582 = sbr.rel (%p580) target = $region36
      $region35: #{tpu_custom_call.1} parent=5 // pred_region
        %s583 = ssub.s32 %s11, 2
        // Predicated region
        $region37: #{tpu_custom_call.1} parent=35 // pred_check
          %p584 = pneg %p92
        $region38: #{tpu_custom_call.1} parent=35 // pred_check_branch
          %586 = sbr.rel (%p584) target = $region40
        $region39: #{tpu_custom_call.1} parent=35 // pred_region
          %s587 = sand.u32 %s77, 1
          %s588 = scalar_lea.sflag [#allocation3], %s587
          %s589 = sand.u32 %s77, 1
          %s590 = smul.addr %s589, 8
          %s591 = scalar_lea.vmem [#allocation2], %s590
          %593 = dma.done %s588, 128
        $region40: #{tpu_custom_call.1} parent=35 // pred_fallthru
          _
      $region36: #{tpu_custom_call.1} parent=5 // pred_fallthru
        _
    $region6: #{tpu_custom_call.1} parent=1 // loop_footer
      %s15 = sadd.s32 1, %s11
    $region7: #{tpu_custom_call.1} parent=1 // loop_footer_branch
      %10 = sbr.rel target = $region3
    $region8: #{tpu_custom_call.1} parent=1 // loop_exit
      _
    %594 = vsyncpa [#allocation3], 1
    %s595 = scalar_lea.sflag [#allocation3], 1
    %596 = vsyncpa %s595, 1

</llo_original>
